<compile_context>
chip_gen: v6e
topology: v6e:2x2x1
jax: 0.10.0
libtpu: 0.0.40
codegen_flags: <defaults>
</compile_context>

<pallas_src>
import jax
import jax.numpy as jnp
from jax.experimental import pallas as pl
from jax.experimental.pallas import tpu as pltpu

# PyTorch module dims (weights stored as (in, out): h = x @ W + b == x @ W_pt.T + b)
DIMS = [(15, 200), (200, 200), (200, 40), (40, 200), (200, 200), (200, 3)]
RELU_AFTER = [True, False, False, True, True, False]

IN_DIM = 15      # layer-1 K, kept unpadded (pad/cast fused into the kernel)
OUT_DIM = 3      # true output width; kernel stores a narrow (tb, 3) block
HID_PAD = 256    # hidden dims padded 200 -> 256 (128-tile / bf16-sublane aligned)
MXU_N = 128      # layer-6 matmul runs at N=128; store slices back to OUT_DIM


def mlp_kernel(x_ref, w1, b1, w234, b234, w5, b5, w6, b6, o_ref):
    """Entire MLP on-chip: 4 bf16 MXU matmuls with f32 accumulation."""
    f32 = jnp.float32
    bf16 = jnp.bfloat16

    # Layer 1: Linear(15->200) + ReLU.  Cast fused here (x arrives as raw f32).
    x = x_ref[...].astype(bf16)
    h = jnp.dot(x, w1[...], preferred_element_type=f32) + b1[...]
    h = jnp.maximum(h, 0.0)
    # Layers 2-4 folded into one Linear(200->200) (no activation between them
    # in the module), followed by the module's ReLU after layer 4.
    h = jnp.dot(h.astype(bf16), w234[...], preferred_element_type=f32) + b234[...]
    h = jnp.maximum(h, 0.0)
    # Layer 5: Linear(200->200) + ReLU.
    h = jnp.dot(h.astype(bf16), w5[...], preferred_element_type=f32) + b5[...]
    h = jnp.maximum(h, 0.0)
    # Layer 6: Linear(200->3).  Matmul runs at N=128 (padded weight); only the
    # first 3 lanes are stored to the narrow output block.
    y = jnp.dot(h.astype(bf16), w6[...], preferred_element_type=f32) + b6[...]
    o_ref[...] = y[:, :OUT_DIM].astype(o_ref.dtype)


def prepare_params(params):
    """Fold layers 2-4, pad hidden dims to 256 / final N to 128, cast to bf16."""
    (w1, b1), (w2, b2), (w3, b3), (w4, b4), (w5, b5), (w6, b6) = params
    f32, bf16 = jnp.float32, jnp.bfloat16

    # The fold is valid only because the module has NO activation after layers
    # 2 and 3; the ReLU after layer 4 is applied after the folded matmul.
    assert RELU_AFTER == [True, False, False, True, True, False], RELU_AFTER

    # h4 = ((h1@W2 + b2)@W3 + b3)@W4 + b4  ==  h1 @ (W2 W3 W4) + b234   (in f32)
    w234 = (w2 @ w3) @ w4
    b234 = (b2 @ w3 + b3) @ w4 + b4

    hp = HID_PAD - DIMS[0][1]          # 256 - 200
    w1p = jnp.pad(w1, ((0, 0), (0, hp)))
    b1p = jnp.pad(b1, ((0, 0), (0, hp)))
    w234p = jnp.pad(w234, ((0, hp), (0, hp)))
    b234p = jnp.pad(b234, ((0, 0), (0, hp)))
    w5p = jnp.pad(w5, ((0, hp), (0, hp)))
    b5p = jnp.pad(b5, ((0, 0), (0, hp)))
    w6p = jnp.pad(w6, ((0, hp), (0, MXU_N - OUT_DIM)))
    b6p = jnp.pad(b6, ((0, 0), (0, MXU_N - OUT_DIM)))

    return (w1p.astype(bf16), b1p.astype(f32),
            w234p.astype(bf16), b234p.astype(f32),
            w5p.astype(bf16), b5p.astype(f32),
            w6p.astype(bf16), b6p.astype(f32))


def _plan_batch(B):
    """Return (padded_B, batch_tile): padded_B % tile == 0, tile % 8 == 0."""
    Bp = -(-B // 8) * 8                 # round batch up to a multiple of 8
    if Bp <= 1024:
        return Bp, Bp                   # single grid step; overhead amortized
    # Large batch: 1K-2K row tiles so per-step MXU work dominates the ~0.35 us
    # fixed step overhead; 2048 only when it still leaves >= 4 grid steps.
    tb = 2048 if Bp >= 4 * 2048 else 1024
    n = -(-Bp // tb)
    return n * tb, tb


def mlp_forward(x, prepared, *, batch_tile=None):
    B = x.shape[0]
    if batch_tile is None:
        Bp, tb = _plan_batch(B)
    else:
        tb = batch_tile
        Bp = -(-B // tb) * tb
    assert tb % 8 == 0 and Bp % tb == 0, (B, Bp, tb)
    grid = (Bp // tb,)

    xp = x if Bp == B else jnp.pad(x, ((0, Bp - B), (0, 0)))

    def full_spec(a):
        # Grid-invariant full-array block: fetched once, not re-DMA'd per step.
        return pl.BlockSpec(a.shape, lambda i: (0, 0))

    in_specs = [pl.BlockSpec((tb, IN_DIM), lambda i: (i, 0))]
    in_specs += [full_spec(a) for a in prepared]
    out_spec = pl.BlockSpec((tb, OUT_DIM), lambda i: (i, 0))

    out = pl.pallas_call(
        mlp_kernel,
        out_shape=jax.ShapeDtypeStruct((Bp, OUT_DIM), jnp.float32),
        grid_spec=pltpu.PrefetchScalarGridSpec(
            num_scalar_prefetch=0,
            grid=grid,
            in_specs=in_specs,
            out_specs=out_spec,
        ),
        compiler_params=pltpu.CompilerParams(
            dimension_semantics=("parallel",),
            # Guardrail that fits v5e/v6e (128 MiB) and v7x (64 MiB physical).
            vmem_limit_bytes=32 * 1024 * 1024,
        ),
    )(xp, *prepared)

    return out if Bp == B else out[:B]


def init_params(key):
    """PyTorch nn.Linear default init: U(-1/sqrt(fan_in), +1/sqrt(fan_in))."""
    params = []
    for (din, dout) in DIMS:
        key, kw, kb = jax.random.split(key, 3)
        bound = 1.0 / (din ** 0.5)
        w = jax.random.uniform(kw, (din, dout), jnp.float32, -bound, bound)
        b = jax.random.uniform(kb, (1, dout), jnp.float32, -bound, bound)
        params.append((w, b))
    return params


def mlp_reference(x, params):
    """Full-precision (f32) PyTorch-equivalent forward."""
    h = x
    for (w, b), relu in zip(params, RELU_AFTER):
        h = h @ w + b
        if relu:
            h = jnp.maximum(h, 0.0)
    return h


def mlp_reference_prepared(x, prepared):
    """Same numerics as the kernel (bf16 operands, f32 accumulate, folded 2-4)."""
    w1, b1, w234, b234, w5, b5, w6, b6 = prepared
    bf16, f32 = jnp.bfloat16, jnp.float32
    h = x.astype(bf16)
    h = jnp.maximum(jnp.dot(h, w1, preferred_element_type=f32) + b1, 0.0)
    h = jnp.maximum(jnp.dot(h.astype(bf16), w234, preferred_element_type=f32) + b234, 0.0)
    h = jnp.maximum(jnp.dot(h.astype(bf16), w5, preferred_element_type=f32) + b5, 0.0)
    y = jnp.dot(h.astype(bf16), w6, preferred_element_type=f32) + b6
    return y[:, :OUT_DIM]


if __name__ == "__main__":
    key = jax.random.PRNGKey(0)
    params = init_params(key)
    prepared = prepare_params(params)

    # Case 1: tiny batch, not a multiple of 8 -> padded to 8, single grid step.
    x1 = jax.random.normal(jax.random.fold_in(key, 123), (4, IN_DIM), jnp.float32)
    o1 = jax.block_until_ready(mlp_forward(x1, prepared))
    assert o1.shape == (4, OUT_DIM), o1.shape
    assert jnp.allclose(o1, mlp_reference_prepared(x1, prepared), atol=2e-3, rtol=2e-3), (
        float(jnp.max(jnp.abs(o1 - mlp_reference_prepared(x1, prepared)))))
    assert jnp.allclose(o1, mlp_reference(x1, params), atol=3e-2, rtol=3e-2), (
        float(jnp.max(jnp.abs(o1 - mlp_reference(x1, params)))))

    # Case 2: multi-step grid (forced small tile so shapes stay small): 4 steps.
    x2 = jax.random.normal(jax.random.fold_in(key, 456), (64, IN_DIM), jnp.float32)
    o2 = jax.block_until_ready(mlp_forward(x2, prepared, batch_tile=16))
    assert o2.shape == (64, OUT_DIM), o2.shape
    assert jnp.allclose(o2, mlp_reference(x2, params), atol=3e-2, rtol=3e-2), (
        float(jnp.max(jnp.abs(o2 - mlp_reference(x2, params)))))

    # Case 3: multi-step grid + batch padding (B=30, tile=8 -> padded to 32).
    x3 = jax.random.normal(jax.random.fold_in(key, 789), (30, IN_DIM), jnp.float32)
    o3 = jax.block_until_ready(mlp_forward(x3, prepared, batch_tile=8))
    assert o3.shape == (30, OUT_DIM), o3.shape
    assert jnp.allclose(o3, mlp_reference(x3, params), atol=3e-2, rtol=3e-2), (
        float(jnp.max(jnp.abs(o3 - mlp_reference(x3, params)))))

    print("KERNEL_OK")
</pallas_src>

<mosaic_0001>
module attributes {stable_mosaic.version = 11 : i64} {
  func.func @mlp_kernel(%arg0: i32, %arg1: memref<8x15xf32, #tpu.memory_space<vmem>>, %arg2: memref<15x256xbf16, #tpu.memory_space<vmem>>, %arg3: memref<1x256xf32, #tpu.memory_space<vmem>>, %arg4: memref<256x256xbf16, #tpu.memory_space<vmem>>, %arg5: memref<1x256xf32, #tpu.memory_space<vmem>>, %arg6: memref<256x256xbf16, #tpu.memory_space<vmem>>, %arg7: memref<1x256xf32, #tpu.memory_space<vmem>>, %arg8: memref<256x128xbf16, #tpu.memory_space<vmem>>, %arg9: memref<1x128xf32, #tpu.memory_space<vmem>>, %arg10: memref<8x3xf32, #tpu.memory_space<vmem>>) attributes {dimension_semantics = [#tpu.dimension_semantics<parallel>], iteration_bounds = array<i64: 1>, scalar_prefetch = 0 : i64, scratch_operands = 0 : i64, tpu.core_type = #tpu.core_type<tc>, window_params = [{transform_indices = @transform_0, window_bounds = array<i64: 8, 15>}, {pipeline_mode = #tpu.pipeline_mode<synchronous>, transform_indices = @transform_1, window_bounds = array<i64: 15, 256>}, {pipeline_mode = #tpu.pipeline_mode<synchronous>, transform_indices = @transform_2, window_bounds = array<i64: 1, 256>}, {pipeline_mode = #tpu.pipeline_mode<synchronous>, transform_indices = @transform_3, window_bounds = array<i64: 256, 256>}, {pipeline_mode = #tpu.pipeline_mode<synchronous>, transform_indices = @transform_4, window_bounds = array<i64: 1, 256>}, {pipeline_mode = #tpu.pipeline_mode<synchronous>, transform_indices = @transform_5, window_bounds = array<i64: 256, 256>}, {pipeline_mode = #tpu.pipeline_mode<synchronous>, transform_indices = @transform_6, window_bounds = array<i64: 1, 256>}, {pipeline_mode = #tpu.pipeline_mode<synchronous>, transform_indices = @transform_7, window_bounds = array<i64: 256, 128>}, {pipeline_mode = #tpu.pipeline_mode<synchronous>, transform_indices = @transform_8, window_bounds = array<i64: 1, 128>}, {transform_indices = @transform_9, window_bounds = array<i64: 8, 3>}]} {
    %c0 = arith.constant 0 : index
    %c0_0 = arith.constant 0 : index
    %0 = vector.load %arg1[%c0, %c0_0] : memref<8x15xf32, #tpu.memory_space<vmem>>, vector<8x15xf32>
    %1 = arith.truncf %0 : vector<8x15xf32> to vector<8x15xbf16>
    %c0_1 = arith.constant 0 : index
    %c0_2 = arith.constant 0 : index
    %2 = vector.load %arg2[%c0_1, %c0_2] : memref<15x256xbf16, #tpu.memory_space<vmem>>, vector<15x256xbf16>
    %cst = arith.constant dense<0.000000e+00> : vector<8x256xf32>
    %3 = tpu.matmul %1, %2, %cst {dimension_numbers = #tpu.dot_dimension_numbers<[1], [0], [0], [1], [0, 0, 1, 1], [], []>} : vector<8x15xbf16>, vector<15x256xbf16>, vector<8x256xf32> -> vector<8x256xf32>
    %c0_3 = arith.constant 0 : index
    %c0_4 = arith.constant 0 : index
    %4 = vector.load %arg3[%c0_3, %c0_4] : memref<1x256xf32, #tpu.memory_space<vmem>>, vector<1x256xf32>
    %5 = vector.broadcast %4 : vector<1x256xf32> to vector<8x256xf32>
    %6 = arith.addf %3, %5 : vector<8x256xf32>
    %cst_5 = arith.constant 0.000000e+00 : f32
    %7 = vector.broadcast %cst_5 : f32 to vector<8x256xf32>
    %8 = arith.maximumf %6, %7 : vector<8x256xf32>
    %9 = arith.truncf %8 : vector<8x256xf32> to vector<8x256xbf16>
    %c0_6 = arith.constant 0 : index
    %c0_7 = arith.constant 0 : index
    %10 = vector.load %arg4[%c0_6, %c0_7] : memref<256x256xbf16, #tpu.memory_space<vmem>>, vector<256x256xbf16>
    %cst_8 = arith.constant dense<0.000000e+00> : vector<8x256xf32>
    %11 = tpu.matmul %9, %10, %cst_8 {dimension_numbers = #tpu.dot_dimension_numbers<[1], [0], [0], [1], [0, 0, 1, 1], [], []>} : vector<8x256xbf16>, vector<256x256xbf16>, vector<8x256xf32> -> vector<8x256xf32>
    %c0_9 = arith.constant 0 : index
    %c0_10 = arith.constant 0 : index
    %12 = vector.load %arg5[%c0_9, %c0_10] : memref<1x256xf32, #tpu.memory_space<vmem>>, vector<1x256xf32>
    %13 = vector.broadcast %12 : vector<1x256xf32> to vector<8x256xf32>
    %14 = arith.addf %11, %13 : vector<8x256xf32>
    %cst_11 = arith.constant 0.000000e+00 : f32
    %15 = vector.broadcast %cst_11 : f32 to vector<8x256xf32>
    %16 = arith.maximumf %14, %15 : vector<8x256xf32>
    %17 = arith.truncf %16 : vector<8x256xf32> to vector<8x256xbf16>
    %c0_12 = arith.constant 0 : index
    %c0_13 = arith.constant 0 : index
    %18 = vector.load %arg6[%c0_12, %c0_13] : memref<256x256xbf16, #tpu.memory_space<vmem>>, vector<256x256xbf16>
    %cst_14 = arith.constant dense<0.000000e+00> : vector<8x256xf32>
    %19 = tpu.matmul %17, %18, %cst_14 {dimension_numbers = #tpu.dot_dimension_numbers<[1], [0], [0], [1], [0, 0, 1, 1], [], []>} : vector<8x256xbf16>, vector<256x256xbf16>, vector<8x256xf32> -> vector<8x256xf32>
    %c0_15 = arith.constant 0 : index
    %c0_16 = arith.constant 0 : index
    %20 = vector.load %arg7[%c0_15, %c0_16] : memref<1x256xf32, #tpu.memory_space<vmem>>, vector<1x256xf32>
    %21 = vector.broadcast %20 : vector<1x256xf32> to vector<8x256xf32>
    %22 = arith.addf %19, %21 : vector<8x256xf32>
    %cst_17 = arith.constant 0.000000e+00 : f32
    %23 = vector.broadcast %cst_17 : f32 to vector<8x256xf32>
    %24 = arith.maximumf %22, %23 : vector<8x256xf32>
    %25 = arith.truncf %24 : vector<8x256xf32> to vector<8x256xbf16>
    %c0_18 = arith.constant 0 : index
    %c0_19 = arith.constant 0 : index
    %26 = vector.load %arg8[%c0_18, %c0_19] : memref<256x128xbf16, #tpu.memory_space<vmem>>, vector<256x128xbf16>
    %cst_20 = arith.constant dense<0.000000e+00> : vector<8x128xf32>
    %27 = tpu.matmul %25, %26, %cst_20 {dimension_numbers = #tpu.dot_dimension_numbers<[1], [0], [0], [1], [0, 0, 1, 1], [], []>} : vector<8x256xbf16>, vector<256x128xbf16>, vector<8x128xf32> -> vector<8x128xf32>
    %c0_21 = arith.constant 0 : index
    %c0_22 = arith.constant 0 : index
    %28 = vector.load %arg9[%c0_21, %c0_22] : memref<1x128xf32, #tpu.memory_space<vmem>>, vector<1x128xf32>
    %29 = vector.broadcast %28 : vector<1x128xf32> to vector<8x128xf32>
    %30 = arith.addf %27, %29 : vector<8x128xf32>
    %31 = vector.extract_strided_slice %30 {offsets = [0, 0], sizes = [8, 3], strides = [1, 1]} : vector<8x128xf32> to vector<8x3xf32>
    %c0_23 = arith.constant 0 : index
    %c0_24 = arith.constant 0 : index
    %32 = vector.load %arg10[%c0_23, %c0_24] : memref<8x3xf32, #tpu.memory_space<vmem>>, vector<8x3xf32>
    tpu.vector_store %arg10[%c0_23, %c0_24], %31 {strides = array<i32>} : memref<8x3xf32, #tpu.memory_space<vmem>>, vector<8x3xf32>,
    return
  }
  func.func @transform_0(%arg0: i32) -> (i32, i32) {
    %c0_i32 = arith.constant 0 : i32
    %c0_i32_0 = arith.constant 0 : i32
    return %arg0, %c0_i32 : i32, i32
  }
  func.func @transform_1(%arg0: i32) -> (i32, i32) {
    %c0_i32 = arith.constant 0 : i32
    %c0_i32_0 = arith.constant 0 : i32
    %c0_i32_1 = arith.constant 0 : i32
    return %c0_i32, %c0_i32_0 : i32, i32
  }
  func.func @transform_2(%arg0: i32) -> (i32, i32) {
    %c0_i32 = arith.constant 0 : i32
    %c0_i32_0 = arith.constant 0 : i32
    %c0_i32_1 = arith.constant 0 : i32
    return %c0_i32, %c0_i32_0 : i32, i32
  }
  func.func @transform_3(%arg0: i32) -> (i32, i32) {
    %c0_i32 = arith.constant 0 : i32
    %c0_i32_0 = arith.constant 0 : i32
    %c0_i32_1 = arith.constant 0 : i32
    return %c0_i32, %c0_i32_0 : i32, i32
  }
  func.func @transform_4(%arg0: i32) -> (i32, i32) {
    %c0_i32 = arith.constant 0 : i32
    %c0_i32_0 = arith.constant 0 : i32
    %c0_i32_1 = arith.constant 0 : i32
    return %c0_i32, %c0_i32_0 : i32, i32
  }
  func.func @transform_5(%arg0: i32) -> (i32, i32) {
    %c0_i32 = arith.constant 0 : i32
    %c0_i32_0 = arith.constant 0 : i32
    %c0_i32_1 = arith.constant 0 : i32
    return %c0_i32, %c0_i32_0 : i32, i32
  }
  func.func @transform_6(%arg0: i32) -> (i32, i32) {
    %c0_i32 = arith.constant 0 : i32
    %c0_i32_0 = arith.constant 0 : i32
    %c0_i32_1 = arith.constant 0 : i32
    return %c0_i32, %c0_i32_0 : i32, i32
  }
  func.func @transform_7(%arg0: i32) -> (i32, i32) {
    %c0_i32 = arith.constant 0 : i32
    %c0_i32_0 = arith.constant 0 : i32
    %c0_i32_1 = arith.constant 0 : i32
    return %c0_i32, %c0_i32_0 : i32, i32
  }
  func.func @transform_8(%arg0: i32) -> (i32, i32) {
    %c0_i32 = arith.constant 0 : i32
    %c0_i32_0 = arith.constant 0 : i32
    %c0_i32_1 = arith.constant 0 : i32
    return %c0_i32, %c0_i32_0 : i32, i32
  }
  func.func @transform_9(%arg0: i32) -> (i32, i32) {
    %c0_i32 = arith.constant 0 : i32
    %c0_i32_0 = arith.constant 0 : i32
    return %arg0, %c0_i32 : i32, i32
  }
}

</mosaic_0001>

<llo_original>
// kernel: tpu_custom_call.1
$region0: #{tpu_custom_call.1}
  #allocation0 [shape = 'u32[]', space=smem, size = 0x4, offset = 0x4, fixed_abs, tag = 'smem constant byte address 0x4 - core index']
  #allocation1 [shape = 'u32[144,128]{1,0:T(1,128)}', space=vmem, size = 0x12000, scoped, tag = 'internal scratch']
  %s0 = inlined_call_operand.hbm [shape: f32[8,15], index: 0, kind: input, shape index: {}]
  %s1 = inlined_call_operand.hbm [shape: bf16[15,256], index: 1, kind: input, shape index: {}]
  %s2 = inlined_call_operand.vmem [shape: f32[1,256], index: 2, kind: input, shape index: {}]
  %s3 = inlined_call_operand.hbm [shape: bf16[256,256], index: 3, kind: input, shape index: {}]
  %s4 = inlined_call_operand.vmem [shape: f32[1,256], index: 4, kind: input, shape index: {}]
  %s5 = inlined_call_operand.hbm [shape: bf16[256,256], index: 5, kind: input, shape index: {}]
  %s6 = inlined_call_operand.vmem [shape: f32[1,256], index: 6, kind: input, shape index: {}]
  %s7 = inlined_call_operand.hbm [shape: bf16[256,128], index: 7, kind: input, shape index: {}]
  %s8 = inlined_call_operand.vmem [shape: f32[1,128], index: 8, kind: input, shape index: {}]
  %s9 = inlined_call_operand.vmem [shape: f32[8,3], index: 9, kind: output, shape index: {}]
  %s10 = sld [smem:[#allocation0]]
  $region66: #{tpu_custom_call.1} parent=0
    _
  %s12 = ssub.s32 1, %s10
  %s13 = scalar_select 0, %s12, %s10
  $region1: #{tpu_custom_call.1} parent=0
    #allocation2 [shape = 'u8[4096]{0}', space=vmem, size = 0x1000, scoped, tag = 'input window, operand 0, single buffered']
    #allocation3 [shape = 's32[1]{0}', space=sflag, size = 0x4, scoped, tag = 'scoped memory for tpu_custom_call.1']
    #allocation4 [shape = 'u8[8192]{0}', space=vmem, size = 0x2000, scoped, tag = 'input window, operand 1, single buffered']
    #allocation5 [shape = 's32[1]{0}', space=sflag, size = 0x4, scoped, tag = 'scoped memory for tpu_custom_call.1']
    #allocation6 [shape = 'u8[131072]{0}', space=vmem, size = 0x20000, scoped, tag = 'input window, operand 3, single buffered']
    #allocation7 [shape = 'u8[131072]{0}', space=vmem, size = 0x20000, scoped, tag = 'input window, operand 5, single buffered']
    #allocation8 [shape = 's32[1]{0}', space=sflag, size = 0x4, scoped, tag = 'scoped memory for tpu_custom_call.1']
    #allocation9 [shape = 'u8[65536]{0}', space=vmem, size = 0x10000, scoped, tag = 'input window, operand 7, single buffered']
    %14 = vsyncpa [#allocation3], 0
    %15 = vsyncpa [#allocation5], 0
    %16 = vsyncpa [#allocation8], 0
    // Predicated region
    $region2: #{tpu_custom_call.1} parent=1 // pred_check
      _
    $region3: #{tpu_custom_call.1} parent=1 // pred_check_branch
      %18 = sbr.rel (0) target = $region5
    $region4: #{tpu_custom_call.1} parent=1 // pred_region
      %s20 = ssub.s32 128, 128
      %21 = vsyncadd [#allocation3], %s20
      %s23 = sshll.u32 [#allocation2], 4
      %s24 = int_to_ptr.vmem [resolvable:$true] %s23
      %26 = dma.hbm_to_vmem [thread:$0]  %s0, 128, %s24, [#allocation3]
    $region5: #{tpu_custom_call.1} parent=1 // pred_fallthru
      _
    // Predicated region
    $region6: #{tpu_custom_call.1} parent=1 // pred_check
      _
    $region7: #{tpu_custom_call.1} parent=1 // pred_check_branch
      %28 = sbr.rel (0) target = $region9
    $region8: #{tpu_custom_call.1} parent=1 // pred_region
      %s30 = ssub.s32 256, 256
      %31 = vsyncadd [#allocation5], %s30
      %s32 = sshll.u32 [#allocation4], 4
      %s33 = int_to_ptr.vmem [resolvable:$true] %s32
      %38 = dma.hbm_to_vmem [thread:$0]  %s1, 256, %s33, [#allocation5], 128, 128, 8
    $region9: #{tpu_custom_call.1} parent=1 // pred_fallthru
      _
    // Predicated region
    $region10: #{tpu_custom_call.1} parent=1 // pred_check
      _
    $region11: #{tpu_custom_call.1} parent=1 // pred_check_branch
      %40 = sbr.rel (0) target = $region13
    $region12: #{tpu_custom_call.1} parent=1 // pred_region
      _
    $region13: #{tpu_custom_call.1} parent=1 // pred_fallthru
      _
    // Predicated region
    $region14: #{tpu_custom_call.1} parent=1 // pred_check
      _
    $region15: #{tpu_custom_call.1} parent=1 // pred_check_branch
      %42 = sbr.rel (0) target = $region17
    $region16: #{tpu_custom_call.1} parent=1 // pred_region
      %s44 = ssub.s32 4096, 4096
      %45 = vsyncadd [#allocation5], %s44
      %s46 = sshll.u32 [#allocation6], 4
      %s47 = int_to_ptr.vmem [resolvable:$true] %s46
      %52 = dma.hbm_to_vmem [thread:$0]  %s3, 4096, %s47, [#allocation5], 128, 128, 8
    $region17: #{tpu_custom_call.1} parent=1 // pred_fallthru
      _
    // Predicated region
    $region18: #{tpu_custom_call.1} parent=1 // pred_check
      _
    $region19: #{tpu_custom_call.1} parent=1 // pred_check_branch
      %54 = sbr.rel (0) target = $region21
    $region20: #{tpu_custom_call.1} parent=1 // pred_region
      _
    $region21: #{tpu_custom_call.1} parent=1 // pred_fallthru
      _
    // Predicated region
    $region22: #{tpu_custom_call.1} parent=1 // pred_check
      _
    $region23: #{tpu_custom_call.1} parent=1 // pred_check_branch
      %56 = sbr.rel (0) target = $region25
    $region24: #{tpu_custom_call.1} parent=1 // pred_region
      %s58 = ssub.s32 4096, 4096
      %59 = vsyncadd [#allocation8], %s58
      %s60 = sshll.u32 [#allocation7], 4
      %s61 = int_to_ptr.vmem [resolvable:$true] %s60
      %66 = dma.hbm_to_vmem [thread:$0]  %s5, 4096, %s61, [#allocation8], 128, 128, 8
    $region25: #{tpu_custom_call.1} parent=1 // pred_fallthru
      _
    // Predicated region
    $region26: #{tpu_custom_call.1} parent=1 // pred_check
      _
    $region27: #{tpu_custom_call.1} parent=1 // pred_check_branch
      %68 = sbr.rel (0) target = $region29
    $region28: #{tpu_custom_call.1} parent=1 // pred_region
      _
    $region29: #{tpu_custom_call.1} parent=1 // pred_fallthru
      _
    // Predicated region
    $region30: #{tpu_custom_call.1} parent=1 // pred_check
      _
    $region31: #{tpu_custom_call.1} parent=1 // pred_check_branch
      %70 = sbr.rel (0) target = $region33
    $region32: #{tpu_custom_call.1} parent=1 // pred_region
      %s72 = ssub.s32 2048, 2048
      %73 = vsyncadd [#allocation8], %s72
      %s74 = sshll.u32 [#allocation9], 4
      %s75 = int_to_ptr.vmem [resolvable:$true] %s74
      %80 = dma.hbm_to_vmem [thread:$0]  %s7, 2048, %s75, [#allocation8], 64, 64, 4
    $region33: #{tpu_custom_call.1} parent=1 // pred_fallthru
      _
    // Predicated region
    $region34: #{tpu_custom_call.1} parent=1 // pred_check
      _
    $region35: #{tpu_custom_call.1} parent=1 // pred_check_branch
      %82 = sbr.rel (0) target = $region37
    $region36: #{tpu_custom_call.1} parent=1 // pred_region
      _
    $region37: #{tpu_custom_call.1} parent=1 // pred_fallthru
      _
    // Predicated region
    $region38: #{tpu_custom_call.1} parent=1 // pred_check
      _
    $region39: #{tpu_custom_call.1} parent=1 // pred_check_branch
      %84 = sbr.rel (0) target = $region41
    $region40: #{tpu_custom_call.1} parent=1 // pred_region
      %85 = dma.done [#allocation3], 128
    $region41: #{tpu_custom_call.1} parent=1 // pred_fallthru
      _
    // Predicated region
    $region42: #{tpu_custom_call.1} parent=1 // pred_check
      _
    $region43: #{tpu_custom_call.1} parent=1 // pred_check_branch
      %87 = sbr.rel (0) target = $region45
    $region44: #{tpu_custom_call.1} parent=1 // pred_region
      %88 = dma.done [#allocation5], 256
    $region45: #{tpu_custom_call.1} parent=1 // pred_fallthru
      _
    // Predicated region
    $region46: #{tpu_custom_call.1} parent=1 // pred_check
      _
    $region47: #{tpu_custom_call.1} parent=1 // pred_check_branch
      %90 = sbr.rel (0) target = $region49
    $region48: #{tpu_custom_call.1} parent=1 // pred_region
      %91 = dma.done [#allocation5], 4096
    $region49: #{tpu_custom_call.1} parent=1 // pred_fallthru
      _
    // Predicated region
    $region50: #{tpu_custom_call.1} parent=1 // pred_check
      _
    $region51: #{tpu_custom_call.1} parent=1 // pred_check_branch
      %93 = sbr.rel (0) target = $region53
    $region52: #{tpu_custom_call.1} parent=1 // pred_region
      %94 = dma.done [#allocation8], 4096
    $region53: #{tpu_custom_call.1} parent=1 // pred_fallthru
      _
    // Predicated region
    $region54: #{tpu_custom_call.1} parent=1 // pred_check
      _
    $region55: #{tpu_custom_call.1} parent=1 // pred_check_branch
      %96 = sbr.rel (0) target = $region57
    $region56: #{tpu_custom_call.1} parent=1 // pred_region
      %97 = dma.done [#allocation8], 2048
    $region57: #{tpu_custom_call.1} parent=1 // pred_fallthru
      _
    %v99 = vld [vmem:[#allocation2] sm:$0xff]
    %v100 = vpack.c.bf16 %v99, %v99
    %v101 = vld [vmem:[#allocation4] sm:$0xff]
    %v102 = vld [vmem:[#allocation4 + $0x8] sm:$0xff]
    %v103 = vld [vmem:[%s2] sm:$0x3]
    %v105 = vlaneseq
    %v106 = vshrl.u32 %v105, 7
    %v107 = vsub.s32 0, %v106
    %v108 = vrot.slane %v103, %v107
    %v109 = vlaneseq
    %v110 = vshrl.u32 %v109, 7
    %v111 = vsub.s32 1, %v110
    %v112 = vrot.slane %v103, %v111
    %v117 = vunpack.c.l.b16 %v101
    %v118 = vunpack.c.h.b16 %v101
    %v119 = vunpack.c.l.b16 %v102
    %v120 = vunpack.c.h.b16 %v102
    %v121 = vpack.c.b16 %v119, %v117
    %v122 = vpack.c.b16 %v120, %v118
    %vm123 = vcmask 121856
    %v125 = vsel %vm123, %v100, 0
    %vm127 = vcmask 1046528
    %vm128 = vcmask 1047552
    %v129 = vsel %vm127, 4294967295, 65535
    %v130 = vsel %vm128, %v129, 0
    %v132 = vand.u32 %v121, %v130
    %v135 = vand.u32 %v122, %v130
    %137 = vmatprep.subr.bf16.mxu0 0
    %138 = vmatpush1.bf16.msra.mxu0 0
    %139 = vmatprep.subr.bf16.mxu0 0
    %140 = vmatpush1.bf16.msra.mxu0 0
    %141 = vmatprep.subr.bf16.mxu0 0
    %142 = vmatpush1.bf16.msra.mxu0 0
    %143 = vmatprep.subr.bf16.mxu0 0
    %144 = vmatpush1.bf16.msra.mxu0 0
    %145 = vmatprep.subr.bf16.mxu0 0
    %146 = vmatpush1.bf16.msra.mxu0 0
    %147 = vmatprep.subr.bf16.mxu0 0
    %148 = vmatpush1.bf16.msra.mxu0 0
    %149 = vmatprep.subr.bf16.mxu0 0
    %150 = vmatpush1.bf16.msra.mxu0 0
    %151 = vmatprep.subr.bf16.mxu0 %v135
    %152 = vmatpush1.bf16.msra.mxu0 %v132
    %153 = vmatprep.subr.bf16.mxu0 0
    %154 = vmatpush2.bf16.msra.mxu0 0
    %155 = vmatprep.subr.bf16.mxu0 0
    %156 = vmatpush2.bf16.msra.mxu0 0
    %157 = vmatprep.subr.bf16.mxu0 0
    %158 = vmatpush2.bf16.msra.mxu0 0
    %159 = vmatprep.subr.bf16.mxu0 0
    %160 = vmatpush2.bf16.msra.mxu0 0
    %161 = vmatprep.subr.bf16.mxu0 0
    %162 = vmatpush2.bf16.msra.mxu0 0
    %163 = vmatprep.subr.bf16.mxu0 0
    %164 = vmatpush2.bf16.msra.mxu0 0
    %165 = vmatprep.subr.bf16.mxu0 0
    %166 = vmatpush2.bf16.msra.mxu0 0
    %167 = vmatprep.subr.bf16.mxu0 0
    %168 = vmatpush2.bf16.msra.mxu0 0
    %169 = vmatprep.mubr.bf16.mxu0 0
    %170 = vmatmul.mubr.bf16.gmra.mxu0 %v125
    %v171 = vpop.f32.mrf.mxu0
    %v172 = vadd.f32 %v108, %v171
    %v173 = vpop.f32.mrf.mxu0
    %v174 = vadd.f32 %v112, %v173
    %v175 = vpop.f32.mrf.mxu0
    %v176 = vpop.f32.mrf.mxu0
    %177 = vdwg.mxu0
    %v178 = vmax.f32 %v172, 0.0
    %v179 = vmax.f32 %v174, 0.0
    %v180 = vpack.c.bf16 %v178, %v178
    %v181 = vpack.c.bf16 %v179, %v179
    %v182 = vld [vmem:[#allocation6] sm:$0xff]
    %v183 = vld [vmem:[#allocation6 + $0x8] sm:$0xff]
    %v184 = vld [vmem:[#allocation6 + $0x10] sm:$0xff]
    %v185 = vld [vmem:[#allocation6 + $0x18] sm:$0xff]
    %v186 = vld [vmem:[#allocation6 + $0x20] sm:$0xff]
    %v187 = vld [vmem:[#allocation6 + $0x28] sm:$0xff]
    %v188 = vld [vmem:[#allocation6 + $0x30] sm:$0xff]
    %v189 = vld [vmem:[#allocation6 + $0x38] sm:$0xff]
    %v190 = vld [vmem:[#allocation6 + $0x40] sm:$0xff]
    %v191 = vld [vmem:[#allocation6 + $0x48] sm:$0xff]
    %v192 = vld [vmem:[#allocation6 + $0x50] sm:$0xff]
    %v193 = vld [vmem:[#allocation6 + $0x58] sm:$0xff]
    %v194 = vld [vmem:[#allocation6 + $0x60] sm:$0xff]
    %v195 = vld [vmem:[#allocation6 + $0x68] sm:$0xff]
    %v196 = vld [vmem:[#allocation6 + $0x70] sm:$0xff]
    %v197 = vld [vmem:[#allocation6 + $0x78] sm:$0xff]
    %v198 = vld [vmem:[#allocation6 + $0x80] sm:$0xff]
    %v199 = vld [vmem:[#allocation6 + $0x88] sm:$0xff]
    %v200 = vld [vmem:[#allocation6 + $0x90] sm:$0xff]
    %v201 = vld [vmem:[#allocation6 + $0x98] sm:$0xff]
    %v202 = vld [vmem:[#allocation6 + $0xa0] sm:$0xff]
    %v203 = vld [vmem:[#allocation6 + $0xa8] sm:$0xff]
    %v204 = vld [vmem:[#allocation6 + $0xb0] sm:$0xff]
    %v205 = vld [vmem:[#allocation6 + $0xb8] sm:$0xff]
    %v206 = vld [vmem:[#allocation6 + $0xc0] sm:$0xff]
    %v207 = vld [vmem:[#allocation6 + $0xc8] sm:$0xff]
    %v208 = vld [vmem:[#allocation6 + $0xd0] sm:$0xff]
    %v209 = vld [vmem:[#allocation6 + $0xd8] sm:$0xff]
    %v210 = vld [vmem:[#allocation6 + $0xe0] sm:$0xff]
    %v211 = vld [vmem:[#allocation6 + $0xe8] sm:$0xff]
    %v212 = vld [vmem:[#allocation6 + $0xf0] sm:$0xff]
    %v213 = vld [vmem:[#allocation6 + $0xf8] sm:$0xff]
    %v214 = vld [vmem:[%s4] sm:$0x3]
    %v216 = vlaneseq
    %v217 = vshrl.u32 %v216, 7
    %v218 = vsub.s32 0, %v217
    %v219 = vrot.slane %v214, %v218
    %v220 = vlaneseq
    %v221 = vshrl.u32 %v220, 7
    %v222 = vsub.s32 1, %v221
    %v223 = vrot.slane %v214, %v222
    %v258 = vunpack.c.l.b16 %v182
    %v259 = vunpack.c.h.b16 %v182
    %v260 = vunpack.c.l.b16 %v183
    %v261 = vunpack.c.h.b16 %v183
    %v262 = vunpack.c.l.b16 %v184
    %v263 = vunpack.c.h.b16 %v184
    %v264 = vunpack.c.l.b16 %v185
    %v265 = vunpack.c.h.b16 %v185
    %v266 = vunpack.c.l.b16 %v186
    %v267 = vunpack.c.h.b16 %v186
    %v268 = vunpack.c.l.b16 %v187
    %v269 = vunpack.c.h.b16 %v187
    %v270 = vunpack.c.l.b16 %v188
    %v271 = vunpack.c.h.b16 %v188
    %v272 = vunpack.c.l.b16 %v189
    %v273 = vunpack.c.h.b16 %v189
    %v274 = vunpack.c.l.b16 %v190
    %v275 = vunpack.c.h.b16 %v190
    %v276 = vunpack.c.l.b16 %v191
    %v277 = vunpack.c.h.b16 %v191
    %v278 = vunpack.c.l.b16 %v192
    %v279 = vunpack.c.h.b16 %v192
    %v280 = vunpack.c.l.b16 %v193
    %v281 = vunpack.c.h.b16 %v193
    %v282 = vunpack.c.l.b16 %v194
    %v283 = vunpack.c.h.b16 %v194
    %v284 = vunpack.c.l.b16 %v195
    %v285 = vunpack.c.h.b16 %v195
    %v286 = vunpack.c.l.b16 %v196
    %v287 = vunpack.c.h.b16 %v196
    %v288 = vunpack.c.l.b16 %v197
    %v289 = vunpack.c.h.b16 %v197
    %v290 = vunpack.c.l.b16 %v198
    %v291 = vunpack.c.h.b16 %v198
    %v292 = vunpack.c.l.b16 %v199
    %v293 = vunpack.c.h.b16 %v199
    %v294 = vunpack.c.l.b16 %v200
    %v295 = vunpack.c.h.b16 %v200
    %v296 = vunpack.c.l.b16 %v201
    %v297 = vunpack.c.h.b16 %v201
    %v298 = vunpack.c.l.b16 %v202
    %v299 = vunpack.c.h.b16 %v202
    %v300 = vunpack.c.l.b16 %v203
    %v301 = vunpack.c.h.b16 %v203
    %v302 = vunpack.c.l.b16 %v204
    %v303 = vunpack.c.h.b16 %v204
    %v304 = vunpack.c.l.b16 %v205
    %v305 = vunpack.c.h.b16 %v205
    %v306 = vunpack.c.l.b16 %v206
    %v307 = vunpack.c.h.b16 %v206
    %v308 = vunpack.c.l.b16 %v207
    %v309 = vunpack.c.h.b16 %v207
    %v310 = vunpack.c.l.b16 %v208
    %v311 = vunpack.c.h.b16 %v208
    %v312 = vunpack.c.l.b16 %v209
    %v313 = vunpack.c.h.b16 %v209
    %v314 = vunpack.c.l.b16 %v210
    %v315 = vunpack.c.h.b16 %v210
    %v316 = vunpack.c.l.b16 %v211
    %v317 = vunpack.c.h.b16 %v211
    %v318 = vunpack.c.l.b16 %v212
    %v319 = vunpack.c.h.b16 %v212
    %v320 = vunpack.c.l.b16 %v213
    %v321 = vunpack.c.h.b16 %v213
    %v322 = vpack.c.b16 %v260, %v258
    %v323 = vpack.c.b16 %v261, %v259
    %v324 = vpack.c.b16 %v264, %v262
    %v325 = vpack.c.b16 %v265, %v263
    %v326 = vpack.c.b16 %v268, %v266
    %v327 = vpack.c.b16 %v269, %v267
    %v328 = vpack.c.b16 %v272, %v270
    %v329 = vpack.c.b16 %v273, %v271
    %v330 = vpack.c.b16 %v276, %v274
    %v331 = vpack.c.b16 %v277, %v275
    %v332 = vpack.c.b16 %v280, %v278
    %v333 = vpack.c.b16 %v281, %v279
    %v334 = vpack.c.b16 %v284, %v282
    %v335 = vpack.c.b16 %v285, %v283
    %v336 = vpack.c.b16 %v288, %v286
    %v337 = vpack.c.b16 %v289, %v287
    %v338 = vpack.c.b16 %v292, %v290
    %v339 = vpack.c.b16 %v293, %v291
    %v340 = vpack.c.b16 %v296, %v294
    %v341 = vpack.c.b16 %v297, %v295
    %v342 = vpack.c.b16 %v300, %v298
    %v343 = vpack.c.b16 %v301, %v299
    %v344 = vpack.c.b16 %v304, %v302
    %v345 = vpack.c.b16 %v305, %v303
    %v346 = vpack.c.b16 %v308, %v306
    %v347 = vpack.c.b16 %v309, %v307
    %v348 = vpack.c.b16 %v312, %v310
    %v349 = vpack.c.b16 %v313, %v311
    %v350 = vpack.c.b16 %v316, %v314
    %v351 = vpack.c.b16 %v317, %v315
    %v352 = vpack.c.b16 %v320, %v318
    %v353 = vpack.c.b16 %v321, %v319
    %386 = vmatprep.subr.bf16.mxu0 %v337
    %387 = vmatpush1.bf16.msra.mxu0 %v336
    %388 = vmatprep.subr.bf16.mxu0 %v335
    %389 = vmatpush1.bf16.msra.mxu0 %v334
    %390 = vmatprep.subr.bf16.mxu0 %v333
    %391 = vmatpush1.bf16.msra.mxu0 %v332
    %392 = vmatprep.subr.bf16.mxu0 %v331
    %393 = vmatpush1.bf16.msra.mxu0 %v330
    %394 = vmatprep.subr.bf16.mxu0 %v329
    %395 = vmatpush1.bf16.msra.mxu0 %v328
    %396 = vmatprep.subr.bf16.mxu0 %v327
    %397 = vmatpush1.bf16.msra.mxu0 %v326
    %398 = vmatprep.subr.bf16.mxu0 %v325
    %399 = vmatpush1.bf16.msra.mxu0 %v324
    %400 = vmatprep.subr.bf16.mxu0 %v323
    %401 = vmatpush1.bf16.msra.mxu0 %v322
    %402 = vmatprep.subr.bf16.mxu0 %v353
    %403 = vmatpush2.bf16.msra.mxu0 %v352
    %404 = vmatprep.subr.bf16.mxu0 %v351
    %405 = vmatpush2.bf16.msra.mxu0 %v350
    %406 = vmatprep.subr.bf16.mxu0 %v349
    %407 = vmatpush2.bf16.msra.mxu0 %v348
    %408 = vmatprep.subr.bf16.mxu0 %v347
    %409 = vmatpush2.bf16.msra.mxu0 %v346
    %410 = vmatprep.subr.bf16.mxu0 %v345
    %411 = vmatpush2.bf16.msra.mxu0 %v344
    %412 = vmatprep.subr.bf16.mxu0 %v343
    %413 = vmatpush2.bf16.msra.mxu0 %v342
    %414 = vmatprep.subr.bf16.mxu0 %v341
    %415 = vmatpush2.bf16.msra.mxu0 %v340
    %416 = vmatprep.subr.bf16.mxu0 %v339
    %417 = vmatpush2.bf16.msra.mxu0 %v338
    %418 = vmatprep.mubr.bf16.mxu0 %v181
    %419 = vmatmul.mubr.bf16.gmra.mxu0 %v180
    %v420 = vpop.f32.mrf.mxu0
    %v421 = vadd.f32 %v219, %v420
    %v422 = vpop.f32.mrf.mxu0
    %v423 = vadd.f32 %v223, %v422
    %v424 = vpop.f32.mrf.mxu0
    %v425 = vpop.f32.mrf.mxu0
    %426 = vdwg.mxu0
    %v427 = vmax.f32 %v421, 0.0
    %v428 = vmax.f32 %v423, 0.0
    %v429 = vpack.c.bf16 %v427, %v427
    %v430 = vpack.c.bf16 %v428, %v428
    %v431 = vld [vmem:[#allocation7] sm:$0xff]
    %v432 = vld [vmem:[#allocation7 + $0x8] sm:$0xff]
    %v433 = vld [vmem:[#allocation7 + $0x10] sm:$0xff]
    %v434 = vld [vmem:[#allocation7 + $0x18] sm:$0xff]
    %v435 = vld [vmem:[#allocation7 + $0x20] sm:$0xff]
    %v436 = vld [vmem:[#allocation7 + $0x28] sm:$0xff]
    %v437 = vld [vmem:[#allocation7 + $0x30] sm:$0xff]
    %v438 = vld [vmem:[#allocation7 + $0x38] sm:$0xff]
    %v439 = vld [vmem:[#allocation7 + $0x40] sm:$0xff]
    %v440 = vld [vmem:[#allocation7 + $0x48] sm:$0xff]
    %v441 = vld [vmem:[#allocation7 + $0x50] sm:$0xff]
    %v442 = vld [vmem:[#allocation7 + $0x58] sm:$0xff]
    %v443 = vld [vmem:[#allocation7 + $0x60] sm:$0xff]
    %v444 = vld [vmem:[#allocation7 + $0x68] sm:$0xff]
    %v445 = vld [vmem:[#allocation7 + $0x70] sm:$0xff]
    %v446 = vld [vmem:[#allocation7 + $0x78] sm:$0xff]
    %v447 = vld [vmem:[#allocation7 + $0x80] sm:$0xff]
    %v448 = vld [vmem:[#allocation7 + $0x88] sm:$0xff]
    %v449 = vld [vmem:[#allocation7 + $0x90] sm:$0xff]
    %v450 = vld [vmem:[#allocation7 + $0x98] sm:$0xff]
    %v451 = vld [vmem:[#allocation7 + $0xa0] sm:$0xff]
    %v452 = vld [vmem:[#allocation7 + $0xa8] sm:$0xff]
    %v453 = vld [vmem:[#allocation7 + $0xb0] sm:$0xff]
    %v454 = vld [vmem:[#allocation7 + $0xb8] sm:$0xff]
    %v455 = vld [vmem:[#allocation7 + $0xc0] sm:$0xff]
    %v456 = vld [vmem:[#allocation7 + $0xc8] sm:$0xff]
    %v457 = vld [vmem:[#allocation7 + $0xd0] sm:$0xff]
    %v458 = vld [vmem:[#allocation7 + $0xd8] sm:$0xff]
    %v459 = vld [vmem:[#allocation7 + $0xe0] sm:$0xff]
    %v460 = vld [vmem:[#allocation7 + $0xe8] sm:$0xff]
    %v461 = vld [vmem:[#allocation7 + $0xf0] sm:$0xff]
    %v462 = vld [vmem:[#allocation7 + $0xf8] sm:$0xff]
    %v463 = vld [vmem:[%s6] sm:$0x3]
    %v465 = vlaneseq
    %v466 = vshrl.u32 %v465, 7
    %v467 = vsub.s32 0, %v466
    %v468 = vrot.slane %v463, %v467
    %v469 = vlaneseq
    %v470 = vshrl.u32 %v469, 7
    %v471 = vsub.s32 1, %v470
    %v472 = vrot.slane %v463, %v471
    %v507 = vunpack.c.l.b16 %v431
    %v508 = vunpack.c.h.b16 %v431
    %v509 = vunpack.c.l.b16 %v432
    %v510 = vunpack.c.h.b16 %v432
    %v511 = vunpack.c.l.b16 %v433
    %v512 = vunpack.c.h.b16 %v433
    %v513 = vunpack.c.l.b16 %v434
    %v514 = vunpack.c.h.b16 %v434
    %v515 = vunpack.c.l.b16 %v435
    %v516 = vunpack.c.h.b16 %v435
    %v517 = vunpack.c.l.b16 %v436
    %v518 = vunpack.c.h.b16 %v436
    %v519 = vunpack.c.l.b16 %v437
    %v520 = vunpack.c.h.b16 %v437
    %v521 = vunpack.c.l.b16 %v438
    %v522 = vunpack.c.h.b16 %v438
    %v523 = vunpack.c.l.b16 %v439
    %v524 = vunpack.c.h.b16 %v439
    %v525 = vunpack.c.l.b16 %v440
    %v526 = vunpack.c.h.b16 %v440
    %v527 = vunpack.c.l.b16 %v441
    %v528 = vunpack.c.h.b16 %v441
    %v529 = vunpack.c.l.b16 %v442
    %v530 = vunpack.c.h.b16 %v442
    %v531 = vunpack.c.l.b16 %v443
    %v532 = vunpack.c.h.b16 %v443
    %v533 = vunpack.c.l.b16 %v444
    %v534 = vunpack.c.h.b16 %v444
    %v535 = vunpack.c.l.b16 %v445
    %v536 = vunpack.c.h.b16 %v445
    %v537 = vunpack.c.l.b16 %v446
    %v538 = vunpack.c.h.b16 %v446
    %v539 = vunpack.c.l.b16 %v447
    %v540 = vunpack.c.h.b16 %v447
    %v541 = vunpack.c.l.b16 %v448
    %v542 = vunpack.c.h.b16 %v448
    %v543 = vunpack.c.l.b16 %v449
    %v544 = vunpack.c.h.b16 %v449
    %v545 = vunpack.c.l.b16 %v450
    %v546 = vunpack.c.h.b16 %v450
    %v547 = vunpack.c.l.b16 %v451
    %v548 = vunpack.c.h.b16 %v451
    %v549 = vunpack.c.l.b16 %v452
    %v550 = vunpack.c.h.b16 %v452
    %v551 = vunpack.c.l.b16 %v453
    %v552 = vunpack.c.h.b16 %v453
    %v553 = vunpack.c.l.b16 %v454
    %v554 = vunpack.c.h.b16 %v454
    %v555 = vunpack.c.l.b16 %v455
    %v556 = vunpack.c.h.b16 %v455
    %v557 = vunpack.c.l.b16 %v456
    %v558 = vunpack.c.h.b16 %v456
    %v559 = vunpack.c.l.b16 %v457
    %v560 = vunpack.c.h.b16 %v457
    %v561 = vunpack.c.l.b16 %v458
    %v562 = vunpack.c.h.b16 %v458
    %v563 = vunpack.c.l.b16 %v459
    %v564 = vunpack.c.h.b16 %v459
    %v565 = vunpack.c.l.b16 %v460
    %v566 = vunpack.c.h.b16 %v460
    %v567 = vunpack.c.l.b16 %v461
    %v568 = vunpack.c.h.b16 %v461
    %v569 = vunpack.c.l.b16 %v462
    %v570 = vunpack.c.h.b16 %v462
    %v571 = vpack.c.b16 %v509, %v507
    %v572 = vpack.c.b16 %v510, %v508
    %v573 = vpack.c.b16 %v513, %v511
    %v574 = vpack.c.b16 %v514, %v512
    %v575 = vpack.c.b16 %v517, %v515
    %v576 = vpack.c.b16 %v518, %v516
    %v577 = vpack.c.b16 %v521, %v519
    %v578 = vpack.c.b16 %v522, %v520
    %v579 = vpack.c.b16 %v525, %v523
    %v580 = vpack.c.b16 %v526, %v524
    %v581 = vpack.c.b16 %v529, %v527
    %v582 = vpack.c.b16 %v530, %v528
    %v583 = vpack.c.b16 %v533, %v531
    %v584 = vpack.c.b16 %v534, %v532
    %v585 = vpack.c.b16 %v537, %v535
    %v586 = vpack.c.b16 %v538, %v536
    %v587 = vpack.c.b16 %v541, %v539
    %v588 = vpack.c.b16 %v542, %v540
    %v589 = vpack.c.b16 %v545, %v543
    %v590 = vpack.c.b16 %v546, %v544
    %v591 = vpack.c.b16 %v549, %v547
    %v592 = vpack.c.b16 %v550, %v548
    %v593 = vpack.c.b16 %v553, %v551
    %v594 = vpack.c.b16 %v554, %v552
    %v595 = vpack.c.b16 %v557, %v555
    %v596 = vpack.c.b16 %v558, %v556
    %v597 = vpack.c.b16 %v561, %v559
    %v598 = vpack.c.b16 %v562, %v560
    %v599 = vpack.c.b16 %v565, %v563
    %v600 = vpack.c.b16 %v566, %v564
    %v601 = vpack.c.b16 %v569, %v567
    %v602 = vpack.c.b16 %v570, %v568
    %635 = vmatprep.subr.bf16.mxu0 %v586
    %636 = vmatpush1.bf16.msra.mxu0 %v585
    %637 = vmatprep.subr.bf16.mxu0 %v584
    %638 = vmatpush1.bf16.msra.mxu0 %v583
    %639 = vmatprep.subr.bf16.mxu0 %v582
    %640 = vmatpush1.bf16.msra.mxu0 %v581
    %641 = vmatprep.subr.bf16.mxu0 %v580
    %642 = vmatpush1.bf16.msra.mxu0 %v579
    %643 = vmatprep.subr.bf16.mxu0 %v578
    %644 = vmatpush1.bf16.msra.mxu0 %v577
    %645 = vmatprep.subr.bf16.mxu0 %v576
    %646 = vmatpush1.bf16.msra.mxu0 %v575
    %647 = vmatprep.subr.bf16.mxu0 %v574
    %648 = vmatpush1.bf16.msra.mxu0 %v573
    %649 = vmatprep.subr.bf16.mxu0 %v572
    %650 = vmatpush1.bf16.msra.mxu0 %v571
    %651 = vmatprep.subr.bf16.mxu0 %v602
    %652 = vmatpush2.bf16.msra.mxu0 %v601
    %653 = vmatprep.subr.bf16.mxu0 %v600
    %654 = vmatpush2.bf16.msra.mxu0 %v599
    %655 = vmatprep.subr.bf16.mxu0 %v598
    %656 = vmatpush2.bf16.msra.mxu0 %v597
    %657 = vmatprep.subr.bf16.mxu0 %v596
    %658 = vmatpush2.bf16.msra.mxu0 %v595
    %659 = vmatprep.subr.bf16.mxu0 %v594
    %660 = vmatpush2.bf16.msra.mxu0 %v593
    %661 = vmatprep.subr.bf16.mxu0 %v592
    %662 = vmatpush2.bf16.msra.mxu0 %v591
    %663 = vmatprep.subr.bf16.mxu0 %v590
    %664 = vmatpush2.bf16.msra.mxu0 %v589
    %665 = vmatprep.subr.bf16.mxu0 %v588
    %666 = vmatpush2.bf16.msra.mxu0 %v587
    %667 = vmatprep.mubr.bf16.mxu0 %v430
    %668 = vmatmul.mubr.bf16.gmra.mxu0 %v429
    %v669 = vpop.f32.mrf.mxu0
    %v670 = vadd.f32 %v468, %v669
    %v671 = vpop.f32.mrf.mxu0
    %v672 = vadd.f32 %v472, %v671
    %v673 = vpop.f32.mrf.mxu0
    %v674 = vpop.f32.mrf.mxu0
    %675 = vdwg.mxu0
    %v676 = vmax.f32 %v670, 0.0
    %v677 = vmax.f32 %v672, 0.0
    %v678 = vpack.c.bf16 %v676, %v676
    %v679 = vpack.c.bf16 %v677, %v677
    %v680 = vld [vmem:[#allocation9] sm:$0xf]
    %v681 = vld [vmem:[#allocation9 + $0x4] sm:$0xf]
    %v682 = vld [vmem:[#allocation9 + $0x8] sm:$0xf]
    %v683 = vld [vmem:[#allocation9 + $0xc] sm:$0xf]
    %v684 = vld [vmem:[#allocation9 + $0x10] sm:$0xf]
    %v685 = vld [vmem:[#allocation9 + $0x14] sm:$0xf]
    %v686 = vld [vmem:[#allocation9 + $0x18] sm:$0xf]
    %v687 = vld [vmem:[#allocation9 + $0x1c] sm:$0xf]
    %v688 = vld [vmem:[#allocation9 + $0x20] sm:$0xf]
    %v689 = vld [vmem:[#allocation9 + $0x24] sm:$0xf]
    %v690 = vld [vmem:[#allocation9 + $0x28] sm:$0xf]
    %v691 = vld [vmem:[#allocation9 + $0x2c] sm:$0xf]
    %v692 = vld [vmem:[#allocation9 + $0x30] sm:$0xf]
    %v693 = vld [vmem:[#allocation9 + $0x34] sm:$0xf]
    %v694 = vld [vmem:[#allocation9 + $0x38] sm:$0xf]
    %v695 = vld [vmem:[#allocation9 + $0x3c] sm:$0xf]
    %v696 = vld [vmem:[#allocation9 + $0x40] sm:$0xf]
    %v697 = vld [vmem:[#allocation9 + $0x44] sm:$0xf]
    %v698 = vld [vmem:[#allocation9 + $0x48] sm:$0xf]
    %v699 = vld [vmem:[#allocation9 + $0x4c] sm:$0xf]
    %v700 = vld [vmem:[#allocation9 + $0x50] sm:$0xf]
    %v701 = vld [vmem:[#allocation9 + $0x54] sm:$0xf]
    %v702 = vld [vmem:[#allocation9 + $0x58] sm:$0xf]
    %v703 = vld [vmem:[#allocation9 + $0x5c] sm:$0xf]
    %v704 = vld [vmem:[#allocation9 + $0x60] sm:$0xf]
    %v705 = vld [vmem:[#allocation9 + $0x64] sm:$0xf]
    %v706 = vld [vmem:[#allocation9 + $0x68] sm:$0xf]
    %v707 = vld [vmem:[#allocation9 + $0x6c] sm:$0xf]
    %v708 = vld [vmem:[#allocation9 + $0x70] sm:$0xf]
    %v709 = vld [vmem:[#allocation9 + $0x74] sm:$0xf]
    %v710 = vld [vmem:[#allocation9 + $0x78] sm:$0xf]
    %v711 = vld [vmem:[#allocation9 + $0x7c] sm:$0xf]
    %v712 = vld [vmem:[%s8] sm:$0x1]
    %v714 = vlaneseq
    %v715 = vshrl.u32 %v714, 7
    %v716 = vsub.s32 0, %v715
    %v717 = vrot.slane %v712, %v716
    %v751 = vunpack.c.l.b16 %v680
    %v752 = vunpack.c.l.b16 %v681
    %v753 = vunpack.c.l.b16 %v682
    %v754 = vunpack.c.l.b16 %v683
    %v755 = vunpack.c.l.b16 %v684
    %v756 = vunpack.c.l.b16 %v685
    %v757 = vunpack.c.l.b16 %v686
    %v758 = vunpack.c.l.b16 %v687
    %v759 = vunpack.c.l.b16 %v688
    %v760 = vunpack.c.l.b16 %v689
    %v761 = vunpack.c.l.b16 %v690
    %v762 = vunpack.c.l.b16 %v691
    %v763 = vunpack.c.l.b16 %v692
    %v764 = vunpack.c.l.b16 %v693
    %v765 = vunpack.c.l.b16 %v694
    %v766 = vunpack.c.l.b16 %v695
    %v767 = vunpack.c.l.b16 %v696
    %v768 = vunpack.c.l.b16 %v697
    %v769 = vunpack.c.l.b16 %v698
    %v770 = vunpack.c.l.b16 %v699
    %v771 = vunpack.c.l.b16 %v700
    %v772 = vunpack.c.l.b16 %v701
    %v773 = vunpack.c.l.b16 %v702
    %v774 = vunpack.c.l.b16 %v703
    %v775 = vunpack.c.l.b16 %v704
    %v776 = vunpack.c.l.b16 %v705
    %v777 = vunpack.c.l.b16 %v706
    %v778 = vunpack.c.l.b16 %v707
    %v779 = vunpack.c.l.b16 %v708
    %v780 = vunpack.c.l.b16 %v709
    %v781 = vunpack.c.l.b16 %v710
    %v782 = vunpack.c.l.b16 %v711
    %v783 = vpack.c.b16 %v752, %v751
    %v784 = vpack.c.b16 %v754, %v753
    %v785 = vpack.c.b16 %v756, %v755
    %v786 = vpack.c.b16 %v758, %v757
    %v787 = vpack.c.b16 %v760, %v759
    %v788 = vpack.c.b16 %v762, %v761
    %v789 = vpack.c.b16 %v764, %v763
    %v790 = vpack.c.b16 %v766, %v765
    %v791 = vpack.c.b16 %v768, %v767
    %v792 = vpack.c.b16 %v770, %v769
    %v793 = vpack.c.b16 %v772, %v771
    %v794 = vpack.c.b16 %v774, %v773
    %v795 = vpack.c.b16 %v776, %v775
    %v796 = vpack.c.b16 %v778, %v777
    %v797 = vpack.c.b16 %v780, %v779
    %v798 = vpack.c.b16 %v782, %v781
    %815 = vmatprep.subr.bf16.mxu0 0
    %816 = vmatpush1.bf16.msra.mxu0 %v790
    %817 = vmatprep.subr.bf16.mxu0 0
    %818 = vmatpush1.bf16.msra.mxu0 %v789
    %819 = vmatprep.subr.bf16.mxu0 0
    %820 = vmatpush1.bf16.msra.mxu0 %v788
    %821 = vmatprep.subr.bf16.mxu0 0
    %822 = vmatpush1.bf16.msra.mxu0 %v787
    %823 = vmatprep.subr.bf16.mxu0 0
    %824 = vmatpush1.bf16.msra.mxu0 %v786
    %825 = vmatprep.subr.bf16.mxu0 0
    %826 = vmatpush1.bf16.msra.mxu0 %v785
    %827 = vmatprep.subr.bf16.mxu0 0
    %828 = vmatpush1.bf16.msra.mxu0 %v784
    %829 = vmatprep.subr.bf16.mxu0 0
    %830 = vmatpush1.bf16.msra.mxu0 %v783
    %831 = vmatprep.subr.bf16.mxu0 0
    %832 = vmatpush2.bf16.msra.mxu0 %v798
    %833 = vmatprep.subr.bf16.mxu0 0
    %834 = vmatpush2.bf16.msra.mxu0 %v797
    %835 = vmatprep.subr.bf16.mxu0 0
    %836 = vmatpush2.bf16.msra.mxu0 %v796
    %837 = vmatprep.subr.bf16.mxu0 0
    %838 = vmatpush2.bf16.msra.mxu0 %v795
    %839 = vmatprep.subr.bf16.mxu0 0
    %840 = vmatpush2.bf16.msra.mxu0 %v794
    %841 = vmatprep.subr.bf16.mxu0 0
    %842 = vmatpush2.bf16.msra.mxu0 %v793
    %843 = vmatprep.subr.bf16.mxu0 0
    %844 = vmatpush2.bf16.msra.mxu0 %v792
    %845 = vmatprep.subr.bf16.mxu0 0
    %846 = vmatpush2.bf16.msra.mxu0 %v791
    %847 = vmatprep.mubr.bf16.mxu0 %v679
    %848 = vmatmul.mubr.bf16.gmra.mxu0 %v678
    %v849 = vpop.f32.mrf.mxu0
    %v850 = vadd.f32 %v717, %v849
    %v851 = vpop.f32.mrf.mxu0
    %v852 = vpop.f32.mrf.mxu0
    %v853 = vpop.f32.mrf.mxu0
    %854 = vdwg.mxu0
    %vm855 = vcmask 23552
    %856 = vst.msk [vmem:[%s9] sm:$0xff] %vm855, %v850
    // Predicated region
    $region58: #{tpu_custom_call.1} parent=1 // pred_check
      _
    $region59: #{tpu_custom_call.1} parent=1 // pred_check_branch
      %858 = sbr.rel (0) target = $region61
    $region60: #{tpu_custom_call.1} parent=1 // pred_region
      _
    $region61: #{tpu_custom_call.1} parent=1 // pred_fallthru
      _
    // Predicated region
    $region62: #{tpu_custom_call.1} parent=1 // pred_check
      _
    $region63: #{tpu_custom_call.1} parent=1 // pred_check_branch
      %860 = sbr.rel (0) target = $region65
    $region64: #{tpu_custom_call.1} parent=1 // pred_region
      _
    $region65: #{tpu_custom_call.1} parent=1 // pred_fallthru
      _
    %861 = vsyncpa [#allocation3], 1
    %862 = vsyncpa [#allocation5], 1
    %863 = vsyncpa [#allocation8], 1

</llo_original>
